<compile_context>
chip_gen: v6e
topology: v6e:2x2x1
jax: 0.10.0
libtpu: 0.0.40
codegen_flags: <defaults>
</compile_context>

<pallas_src>
import functools
import math

import jax
import jax.numpy as jnp
from jax.experimental import pallas as pl
from jax.experimental.pallas import tpu as pltpu


def _vmem_budget_bytes():
    """~75% of physical VMEM, generation-aware (v7x: 64 MiB, v5e/v6e: 128 MiB)."""
    cap = 128 << 20
    try:
        info = pltpu.get_tpu_info()
        cap = int(getattr(info, "vmem_capacity_bytes", cap)) or cap
    except Exception:
        pass
    return int(min(100 << 20, cap * 3 // 4))


# ----------------------------------------------------------------------------
# Fused single pass: pooling + ks-tap conv + sigmoid + rescale per batch slab.
# ----------------------------------------------------------------------------
def _fused_kernel(w_ref, x_ref, o_ref, *, ks, pad, inv_hw):
    x = x_ref[...]                                        # (1, C, HW) native dtype
    c = x.shape[1]

    # Global pooling: sum accumulated in f32 (accuracy), max in native dtype.
    s_sum = jnp.sum(x, axis=-1, dtype=jnp.float32)        # (1, C)
    mx = jnp.max(x, axis=-1).astype(jnp.float32)          # (1, C)
    y = 1.5 * (s_sum * inv_hw) + 1.5 * mx                 # (1, C) f32

    # ks-tap channel conv: static zero-padded shifts of the tiny pooled row,
    # taps read from SMEM (scalar prefetch).  Done ONCE per batch.
    if pad > 0:
        zpad = jnp.zeros((1, pad), jnp.float32)
        y_p = jnp.concatenate([zpad, y, zpad], axis=-1)   # (1, C + 2*pad)
    else:
        y_p = y
    yc = w_ref[0] * y_p[:, 0:c]
    for k in range(1, ks):                                # ks is tiny & static
        yc = yc + w_ref[k] * y_p[:, k:k + c]

    # Sigmoid once per batch; multiply in x's native dtype (no tile upcast).
    s = jax.nn.sigmoid(yc).astype(o_ref.dtype)            # (1, C)
    o_ref[...] = x * s[:, :, None]


# ----------------------------------------------------------------------------
# Fallback pass 1: per-(batch, channel) global sum / max over HW tiles.
# ----------------------------------------------------------------------------
def _pool_kernel(x_ref, y_ref, sum_sc, max_sc, *, inv_hw, hw_valid, t_hw, mask_tail):
    t = pl.program_id(1)

    @pl.when(t == 0)
    def _init():
        sum_sc[...] = jnp.zeros_like(sum_sc)
        max_sc[...] = jnp.full_like(max_sc, -jnp.inf)

    x = x_ref[...]                                        # (1, C, T) native dtype
    if mask_tail:
        lane = jax.lax.broadcasted_iota(jnp.int32, x.shape, 2) + t * t_hw
        x_for_max = jnp.where(lane < hw_valid, x, jnp.full_like(x, -jnp.inf))
    else:
        x_for_max = x

    sum_sc[...] = sum_sc[...] + jnp.sum(x, axis=-1, dtype=jnp.float32)
    max_sc[...] = jnp.maximum(max_sc[...], jnp.max(x_for_max, axis=-1))

    @pl.when(t == pl.num_programs(1) - 1)
    def _finalize():
        y = 1.5 * (sum_sc[...] * inv_hw) + 1.5 * max_sc[...].astype(jnp.float32)
        y_ref[...] = y.reshape(y_ref.shape)               # (1, 1, C)


# ----------------------------------------------------------------------------
# Fallback pass 2: pure per-channel rescale in native dtype.
# ----------------------------------------------------------------------------
def _scale_kernel(s_ref, x_ref, o_ref):
    o_ref[...] = x_ref[...] * s_ref[...]                  # (1,C,1) bcast over (1,C,T)


def _pick_hw_tile(hw_pad, c, itemsize, target_bytes):
    """Largest multiple of 128 that divides hw_pad with block <= target_bytes."""
    cap = max(128, (target_bytes // max(1, c * itemsize)) // 128 * 128)
    best = 128
    t = 128
    while t <= min(hw_pad, cap):
        if hw_pad % t == 0:
            best = t
        t += 128
    return best


def eca_forward(x, conv_weight):
    """x: (B, C, H, W); conv_weight: (ks,). Returns (B, C, H, W) in x.dtype."""
    b, c, h, w = x.shape
    hw = h * w
    ks = int(conv_weight.shape[0])
    pad = ks // 2
    itemsize = x.dtype.itemsize

    x_flat = x.reshape(b, c, hw)
    w_taps = conv_weight.astype(jnp.float32)

    budget = _vmem_budget_bytes()
    slab_bytes = c * hw * itemsize

    # ---- primary: fused single pass (1 read + 1 write of |x|) -----------------
    if 4 * slab_bytes + (2 << 20) <= budget:
        out_flat = pl.pallas_call(
            functools.partial(_fused_kernel, ks=ks, pad=pad, inv_hw=1.0 / hw),
            out_shape=jax.ShapeDtypeStruct((b, c, hw), x_flat.dtype),
            grid_spec=pltpu.PrefetchScalarGridSpec(
                num_scalar_prefetch=1,                    # conv taps -> SMEM
                grid=(b,),
                in_specs=[pl.BlockSpec((1, c, hw), lambda i, _w: (i, 0, 0))],
                out_specs=pl.BlockSpec((1, c, hw), lambda i, _w: (i, 0, 0)),
            ),
            compiler_params=pltpu.CompilerParams(
                dimension_semantics=("parallel",),        # batches across TCs (v7x)
                vmem_limit_bytes=budget,
            ),
            cost_estimate=pl.CostEstimate(
                flops=4 * b * c * hw,
                transcendentals=b * c,
                bytes_accessed=2 * b * c * hw * itemsize,
            ),
        )(w_taps, x_flat)
        return out_flat.reshape(b, c, h, w)

    # ---- fallback: two HW-tiled passes (per-batch slab too big for VMEM) ------
    hw_pad = ((hw + 127) // 128) * 128
    if hw_pad != hw:
        # Zero pad is neutral for the sum (divide by true hw); max is masked
        # in-kernel; output pad lanes are sliced off below.
        x_flat = jnp.pad(x_flat, ((0, 0), (0, 0), (0, hw_pad - hw)))

    target_bytes = max(1 << 20, min(16 << 20, budget // 8))
    t_hw = _pick_hw_tile(hw_pad, c, itemsize, target_bytes)
    n_hw = hw_pad // t_hw

    y = pl.pallas_call(
        functools.partial(_pool_kernel, inv_hw=1.0 / hw, hw_valid=hw,
                          t_hw=t_hw, mask_tail=(hw_pad != hw)),
        out_shape=jax.ShapeDtypeStruct((b, 1, c), jnp.float32),
        grid_spec=pltpu.PrefetchScalarGridSpec(
            num_scalar_prefetch=0,
            grid=(b, n_hw),
            in_specs=[pl.BlockSpec((1, c, t_hw), lambda i, t: (i, 0, t))],
            out_specs=pl.BlockSpec((1, 1, c), lambda i, t: (i, 0, 0)),
            scratch_shapes=[pltpu.VMEM((1, c), jnp.float32),   # running sum (f32)
                            pltpu.VMEM((1, c), x_flat.dtype)], # running max (native)
        ),
        compiler_params=pltpu.CompilerParams(
            dimension_semantics=("parallel", "arbitrary"),
            vmem_limit_bytes=budget,
        ),
        cost_estimate=pl.CostEstimate(
            flops=2 * b * c * hw_pad,
            transcendentals=0,
            bytes_accessed=b * c * hw_pad * itemsize,
        ),
    )(x_flat)

    # Conv + sigmoid hoisted out of the per-tile loop: tiny (B, C) plain JAX.
    y = y.reshape(b, c)
    y_p = jnp.pad(y, ((0, 0), (pad, pad)))
    yc = jnp.zeros_like(y)
    for k in range(ks):
        yc = yc + w_taps[k] * y_p[:, k:k + c]
    s = jax.nn.sigmoid(yc).astype(x_flat.dtype).reshape(b, c, 1)

    out_flat = pl.pallas_call(
        _scale_kernel,
        out_shape=jax.ShapeDtypeStruct((b, c, hw_pad), x_flat.dtype),
        grid_spec=pltpu.PrefetchScalarGridSpec(
            num_scalar_prefetch=0,
            grid=(b, n_hw),
            in_specs=[pl.BlockSpec((1, c, 1), lambda i, t: (i, 0, 0)),
                      pl.BlockSpec((1, c, t_hw), lambda i, t: (i, 0, t))],
            out_specs=pl.BlockSpec((1, c, t_hw), lambda i, t: (i, 0, t)),
        ),
        compiler_params=pltpu.CompilerParams(
            dimension_semantics=("parallel", "parallel"),
            vmem_limit_bytes=budget,
        ),
        cost_estimate=pl.CostEstimate(
            flops=b * c * hw_pad,
            transcendentals=0,
            bytes_accessed=2 * b * c * hw_pad * itemsize,
        ),
    )(s, x_flat)

    if hw_pad != hw:
        out_flat = out_flat[:, :, :hw]
    return out_flat.reshape(b, c, h, w)


def _eca_reference(x, conv_weight):
    """Pure-JAX reference mirroring the PyTorch forward."""
    b, c, h, w = x.shape
    avg = jnp.mean(x, axis=(2, 3))                        # (B, C)
    mx = jnp.max(x, axis=(2, 3))                          # (B, C)
    y = 1.5 * avg + 1.5 * mx                              # (B, C)
    ks = conv_weight.shape[0]
    pad = ks // 2
    y_pad = jnp.pad(y, ((0, 0), (pad, pad)))
    yc = jnp.zeros_like(y)
    for k in range(ks):
        yc = yc + conv_weight[k] * y_pad[:, k:k + c]
    s = jax.nn.sigmoid(yc)
    return x * s[:, :, None, None]


if __name__ == "__main__":
    key = jax.random.PRNGKey(0)
    kx, kw = jax.random.split(key)

    B, C, H, W = 2, 4, 16, 16
    # ks per ECA formula: int(abs((log2(C)+1)/2)) + 2, forced odd -> 3 for C=4
    ks = int(abs((math.log(C, 2) + 1) / 2)) + 2
    ks = ks if ks % 2 else ks + 1

    x = jax.random.normal(kx, (B, C, H, W), dtype=jnp.float32)
    conv_weight = jax.random.normal(kw, (ks,), dtype=jnp.float32) * 0.1

    out = eca_forward(x, conv_weight)
    jax.block_until_ready(out)

    ref = _eca_reference(x, conv_weight)
    assert out.dtype == x.dtype, "output dtype must match input dtype"
    assert jnp.allclose(out, ref, atol=1e-5, rtol=1e-5), "mismatch vs reference"

    print("KERNEL_OK")
</pallas_src>

<mosaic_0001>
module attributes {stable_mosaic.version = 11 : i64} {
  func.func @_fused_kernel(%arg0: i32, %arg1: memref<3xf32, #tpu.memory_space<smem>>, %arg2: memref<1x4x256xf32, #tpu.memory_space<vmem>>, %arg3: memref<1x4x256xf32, #tpu.memory_space<vmem>>) attributes {dimension_semantics = [#tpu.dimension_semantics<parallel>], iteration_bounds = array<i64: 2>, scalar_prefetch = 1 : i64, scratch_operands = 0 : i64, tpu.core_type = #tpu.core_type<tc>, window_params = [{transform_indices = @transform_0, window_bounds = array<i64: 1, 4, 256>}, {transform_indices = @transform_1, window_bounds = array<i64: 1, 4, 256>}]} {
    %c0 = arith.constant 0 : index
    %c0_0 = arith.constant 0 : index
    %c0_1 = arith.constant 0 : index
    %0 = vector.load %arg2[%c0, %c0_0, %c0_1] : memref<1x4x256xf32, #tpu.memory_space<vmem>>, vector<1x4x256xf32>
    %cst = arith.constant dense<0.000000e+00> : vector<1x4xf32>
    %1 = vector.multi_reduction <add>, %0, %cst [2] : vector<1x4x256xf32> to vector<1x4xf32>
    %cst_2 = arith.constant dense<0xFF800000> : vector<1x4xf32>
    %2 = vector.multi_reduction <maximumf>, %0, %cst_2 [2] : vector<1x4x256xf32> to vector<1x4xf32>
    %cst_3 = arith.constant 3.906250e-03 : f32
    %3 = vector.broadcast %cst_3 : f32 to vector<1x4xf32>
    %4 = arith.mulf %1, %3 : vector<1x4xf32>
    %cst_4 = arith.constant 1.500000e+00 : f32
    %5 = vector.broadcast %cst_4 : f32 to vector<1x4xf32>
    %6 = arith.mulf %5, %4 : vector<1x4xf32>
    %cst_5 = arith.constant 1.500000e+00 : f32
    %7 = vector.broadcast %cst_5 : f32 to vector<1x4xf32>
    %8 = arith.mulf %7, %2 : vector<1x4xf32>
    %9 = arith.addf %6, %8 : vector<1x4xf32>
    %cst_6 = arith.constant 0.000000e+00 : f32
    %10 = vector.broadcast %cst_6 : f32 to vector<1x1xf32>
    %11 = tpu.concatenate %10, %9, %10 in 1 : vector<1x1xf32>, vector<1x4xf32>, vector<1x1xf32> -> vector<1x6xf32>
    %c0_7 = arith.constant 0 : index
    %12 = memref.load %arg1[%c0_7] : memref<3xf32, #tpu.memory_space<smem>>
    %13 = vector.extract_strided_slice %11 {offsets = [0, 0], sizes = [1, 4], strides = [1, 1]} : vector<1x6xf32> to vector<1x4xf32>
    %14 = vector.broadcast %12 : f32 to vector<1x4xf32>
    %15 = arith.mulf %14, %13 : vector<1x4xf32>
    %c1 = arith.constant 1 : index
    %16 = memref.load %arg1[%c1] : memref<3xf32, #tpu.memory_space<smem>>
    %17 = vector.extract_strided_slice %11 {offsets = [0, 1], sizes = [1, 4], strides = [1, 1]} : vector<1x6xf32> to vector<1x4xf32>
    %18 = vector.broadcast %16 : f32 to vector<1x4xf32>
    %19 = arith.mulf %18, %17 : vector<1x4xf32>
    %20 = arith.addf %15, %19 : vector<1x4xf32>
    %c2 = arith.constant 2 : index
    %21 = memref.load %arg1[%c2] : memref<3xf32, #tpu.memory_space<smem>>
    %22 = vector.extract_strided_slice %11 {offsets = [0, 2], sizes = [1, 4], strides = [1, 1]} : vector<1x6xf32> to vector<1x4xf32>
    %23 = vector.broadcast %21 : f32 to vector<1x4xf32>
    %24 = arith.mulf %23, %22 : vector<1x4xf32>
    %25 = arith.addf %20, %24 : vector<1x4xf32>
    %26 = arith.negf %25 : vector<1x4xf32>
    %27 = math.exp %26 : vector<1x4xf32>
    %cst_8 = arith.constant 1.000000e+00 : f32
    %28 = vector.broadcast %cst_8 : f32 to vector<1x4xf32>
    %29 = arith.addf %28, %27 : vector<1x4xf32>
    %30 = arith.divf %28, %29 : vector<1x4xf32>
    %31 = vector.shape_cast %30 : vector<1x4xf32> to vector<1x4x1xf32>
    %32 = vector.broadcast %31 : vector<1x4x1xf32> to vector<1x4x256xf32>
    %33 = arith.mulf %0, %32 : vector<1x4x256xf32>
    %c0_9 = arith.constant 0 : index
    %c0_10 = arith.constant 0 : index
    %c0_11 = arith.constant 0 : index
    %34 = vector.load %arg3[%c0_9, %c0_10, %c0_11] : memref<1x4x256xf32, #tpu.memory_space<vmem>>, vector<1x4x256xf32>
    tpu.vector_store %arg3[%c0_9, %c0_10, %c0_11], %33 {strides = array<i32>} : memref<1x4x256xf32, #tpu.memory_space<vmem>>, vector<1x4x256xf32>,
    return
  }
  func.func @transform_0(%arg0: i32, %arg1: memref<3xf32, #tpu.memory_space<smem>>) -> (i32, i32, i32) {
    %c0_i32 = arith.constant 0 : i32
    %c0_i32_0 = arith.constant 0 : i32
    %c0_i32_1 = arith.constant 0 : i32
    return %arg0, %c0_i32, %c0_i32_0 : i32, i32, i32
  }
  func.func @transform_1(%arg0: i32, %arg1: memref<3xf32, #tpu.memory_space<smem>>) -> (i32, i32, i32) {
    %c0_i32 = arith.constant 0 : i32
    %c0_i32_0 = arith.constant 0 : i32
    %c0_i32_1 = arith.constant 0 : i32
    return %arg0, %c0_i32, %c0_i32_0 : i32, i32, i32
  }
}

</mosaic_0001>

<llo_original>
// kernel: tpu_custom_call.1
$region0: #{tpu_custom_call.1}
  #allocation0 [shape = 'u32[]', space=smem, size = 0x4, offset = 0x4, fixed_abs, tag = 'smem constant byte address 0x4 - core index']
  #allocation1 [shape = 'u32[144,128]{1,0:T(1,128)}', space=vmem, size = 0x12000, scoped, tag = 'internal scratch']
  #allocation2 [shape = 's32[1]{0}', space=sflag, size = 0x4, scoped, tag = 'scoped memory for tpu_custom_call.1']
  #allocation3 [shape = 'u8[512]{0}', space=smem, size = 0x200, scoped, tag = 'prefetched SMEM operand 0']
  %s0 = inlined_call_operand.hbm [shape: f32[3], index: 0, kind: input, shape index: {}]
  %s1 = inlined_call_operand.hbm [shape: f32[2,4,256], index: 1, kind: input, shape index: {}]
  %s2 = inlined_call_operand.hbm [shape: f32[2,4,256], index: 2, kind: output, shape index: {}]
  %s3 = sld [smem:[#allocation0]]
  $region41: #{tpu_custom_call.1} parent=0
    _
  %s5 = ssub.s32 1, %s3
  %s6 = scalar_select 0, %s5, %s3
  %8 = dma.hbm_to_smem %s0, 16, [#allocation3], [#allocation2]
  %9 = dma.done [#allocation2], 16
  %10 = sfence
  $region1: #{tpu_custom_call.1} parent=0
    #allocation4 [shape = 'u8[8192]{0}', space=vmem, size = 0x2000, scoped, tag = 'input window, operand 1']
    #allocation5 [shape = 's32[2]{0}', space=sflag, size = 0x8, scoped, tag = 'scoped memory for tpu_custom_call.1']
    #allocation6 [shape = 's32[2]{0}', space=sflag, size = 0x8, scoped, tag = 'scoped memory for tpu_custom_call.1']
    #allocation7 [shape = 'u8[8192]{0}', space=vmem, size = 0x2000, scoped, tag = 'output window, operand 0']
    %11 = vsyncpa [#allocation5], 0
    %s12 = scalar_lea.sflag [#allocation5], 1
    %13 = vsyncpa %s12, 0
    %14 = vsyncpa [#allocation6], 0
    %s15 = scalar_lea.sflag [#allocation6], 1
    %16 = vsyncpa %s15, 0
    loop: start=0, step=1, limit=4
    $region2: #{tpu_custom_call.1} parent=1 // loop_pre_header
      _
    $region3: #{tpu_custom_call.1} parent=1 // loop_header
      %s18 = sphi 0, %s22
      %p19 = scmp.ge.s32.totalorder %s18, 4
      %s28 = sphi 0, %s30
      %s31 = sphi 0, %s28
      %s32 = sphi 0, %s31
      %s48 = sphi 0, %s32
      %s54 = sphi 0, %s56
      %s57 = sphi 0, %s54
      %s58 = sphi 0, %s57
      %s74 = sphi 0, %s58
    $region4: #{tpu_custom_call.1} parent=1 // loop_header_branch
      %21 = sbr.rel (%p19) target = $region8
    $region5: #{tpu_custom_call.1} parent=1 // loop_body
      %s23 = ssub.s32 %s18, 1
      %s24 = ssub.s32 %s18, 2
      %s25 = sadd.s32 %s18, 1
      %s26 = ssub.s32 %s18, %s25
      %p27 = scmp.eq.s32.totalorder %s26, 0
      %s29 = sadd.s32 %s28, 1
      %s30 = scalar_select %p27, %s28, %s29
      %p33 = pneg %p27
      %p34 = scmp.eq.s32.totalorder %s18, 1
      %p35 = por %p33, %p34
      %p36 = scmp.ne.s32.totalorder %s28, %s31
      %p37 = scmp.eq.s32.totalorder %s18, 0
      %p38 = por %p36, %p37
      %p39 = scmp.ne.s32.totalorder %s28, %s31
      %p40 = scmp.eq.s32.totalorder %s23, 1
      %p41 = por %p39, %p40
      %p42 = scmp.ne.s32.totalorder %s31, %s32
      %p43 = scmp.eq.s32.totalorder %s23, 0
      %p44 = por %p42, %p43
      %p45 = scmp.ne.s32.totalorder %s31, %s32
      %p46 = scmp.eq.s32.totalorder %s24, 1
      %p47 = por %p45, %p46
      %p49 = scmp.ne.s32.totalorder %s32, %s48
      %p50 = scmp.eq.s32.totalorder %s24, 0
      %p51 = por %p49, %p50
      %s52 = ssub.s32 %s18, %s25
      %p53 = scmp.eq.s32.totalorder %s52, 0
      %s55 = sadd.s32 %s54, 1
      %s56 = scalar_select %p53, %s54, %s55
      %p59 = pneg %p53
      %p60 = scmp.eq.s32.totalorder %s18, 1
      %p61 = por %p59, %p60
      %p62 = scmp.ne.s32.totalorder %s54, %s57
      %p63 = scmp.eq.s32.totalorder %s18, 0
      %p64 = por %p62, %p63
      %p65 = scmp.ne.s32.totalorder %s54, %s57
      %p66 = scmp.eq.s32.totalorder %s23, 1
      %p67 = por %p65, %p66
      %p68 = scmp.ne.s32.totalorder %s57, %s58
      %p69 = scmp.eq.s32.totalorder %s23, 0
      %p70 = por %p68, %p69
      %p71 = scmp.ne.s32.totalorder %s57, %s58
      %p72 = scmp.eq.s32.totalorder %s24, 1
      %p73 = por %p71, %p72
      %p75 = scmp.ne.s32.totalorder %s58, %s74
      %p76 = scmp.eq.s32.totalorder %s24, 0
      %p77 = por %p75, %p76
      %p78 = scmp.le.s32.totalorder 1, %s18
      %p79 = scmp.lt.s32.totalorder %s18, 3
      %p80 = pnand %p78, %p79
      %p81 = pneg %p80
      // Predicated region
      $region9: #{tpu_custom_call.1} parent=5 // pred_check
        _
      $region10: #{tpu_custom_call.1} parent=5 // pred_check_branch
        %83 = sbr.rel (%p80) target = $region12
      $region11: #{tpu_custom_call.1} parent=5 // pred_region
        %s84 = ssub.s32 %s18, 1
      $region12: #{tpu_custom_call.1} parent=5 // pred_fallthru
        _
      %p85 = scmp.lt.s32.totalorder %s18, 2
      // Predicated region
      $region13: #{tpu_custom_call.1} parent=5 // pred_check
        %p86 = pneg %p85
      $region14: #{tpu_custom_call.1} parent=5 // pred_check_branch
        %88 = sbr.rel (%p86) target = $region16
      $region15: #{tpu_custom_call.1} parent=5 // pred_region
        // Predicated region
        $region17: #{tpu_custom_call.1} parent=15 // pred_check
          %p89 = pneg %p38
        $region18: #{tpu_custom_call.1} parent=15 // pred_check_branch
          %91 = sbr.rel (%p89) target = $region20
        $region19: #{tpu_custom_call.1} parent=15 // pred_region
          %s92 = sand.u32 %s28, 1
          %s93 = scalar_lea.sflag [#allocation5], %s92
          %s94 = sand.u32 %s28, 1
          %s95 = smul.addr %s94, 8
          %s96 = scalar_lea.vmem [#allocation4], %s95
          %s98 = ssub.s32 128, 128
          %99 = vsyncadd %s93, %s98
          %s100 = smul.addr %s18, 2
          %s101 = smul.addr %s100, 64
          %s102 = scalar_lea.hbm %s1, %s101
          %s104 = sshll.u32 %s96, 4
          %s105 = int_to_ptr.vmem [resolvable:$true] %s104
          %107 = dma.hbm_to_vmem [thread:$0]  %s102, 128, %s105, %s93
        $region20: #{tpu_custom_call.1} parent=15 // pred_fallthru
          _
      $region16: #{tpu_custom_call.1} parent=5 // pred_fallthru
        _
      %p108 = scmp.le.s32.totalorder 1, %s18
      %p109 = scmp.lt.s32.totalorder %s18, 3
      %p110 = pnand %p108, %p109
      %p111 = pneg %p110
      // Predicated region
      $region21: #{tpu_custom_call.1} parent=5 // pred_check
        _
      $region22: #{tpu_custom_call.1} parent=5 // pred_check_branch
        %113 = sbr.rel (%p110) target = $region24
      $region23: #{tpu_custom_call.1} parent=5 // pred_region
        %s114 = ssub.s32 %s18, 1
        %s115 = sand.u32 %s31, 1
        %s116 = scalar_lea.sflag [#allocation5], %s115
        %s117 = sand.u32 %s31, 1
        %s118 = smul.addr %s117, 8
        %s119 = scalar_lea.vmem [#allocation4], %s118
        // Predicated region
        $region25: #{tpu_custom_call.1} parent=23 // pred_check
          %p120 = pneg %p44
        $region26: #{tpu_custom_call.1} parent=23 // pred_check_branch
          %122 = sbr.rel (%p120) target = $region28
        $region27: #{tpu_custom_call.1} parent=23 // pred_region
          %123 = dma.done %s116, 128
        $region28: #{tpu_custom_call.1} parent=23 // pred_fallthru
          _
        %s124 = sand.u32 %s31, 1
        %s125 = scalar_lea.sflag [#allocation5], %s124
        %s126 = sand.u32 %s31, 1
        %s127 = smul.addr %s126, 8
        %s128 = scalar_lea.vmem [#allocation4], %s127
        %p129 = pneg %p44
        %p130 = pneg %p41
        %p131 = pneg %p70
        %p132 = pneg %p67
        %s133 = sand.u32 %s57, 1
        %s134 = scalar_lea.sflag [#allocation6], %s133
        %s135 = sand.u32 %s57, 1
        %s136 = smul.addr %s135, 8
        %s137 = scalar_lea.vmem [#allocation7], %s136
        %v138 = vld [vmem:[%s119] sm:$0xff]
        %v140 = vcombine.high %v138, %v138
        %vm142 = vcmask 1043456
        %v143 = vsel %vm142, %v138, 0.0
        %v144 = vsel %vm142, %v140, 0.0
        %v145 = vadd.f32 %v143, %v144
        %146 = vadd.xlane.f32.xlu0 %v145
        %v147 = vpop.xlane.xlu0 %146
        %v148 = vsel %vm142, %v138, -inf
        %v149 = vsel %vm142, %v140, -inf
        %v150 = vmax.f32 %v148, %v149
        %151 = vmax.xlane.f32.xlu0 %v150
        %v152 = vpop.xlane.xlu0 %151
        %v153 = vmul.f32 %v147, 0.00390625
        %v154 = vmul.f32 %v153, 1.5
        %v155 = vmul.f32 %v152, 1.5
        %v156 = vadd.f32 %v154, %v155
        %v158 = vlaneseq
        %v159 = vand.u32 %v158, 127
        %v160 = vadd.s32 %v159, 4294967295
        %v161 = vlaneseq
        %v162 = vshrl.u32 %v161, 7
        %v163 = vsub.s32 %v160, %v162
        %v164 = vrot.slane %v156, %v163
        %vm166 = vcmask 7168
        %v167 = vsel %vm166, 0.0, %v164
        %vm168 = vcmask 39936
        %v169 = vsel %vm168, %v167, 0.0
        %s170 = sld [smem:[#allocation3]]
        %v171 = vstv %s170
        %v172 = vmul.f32 %v171, %v169
        %s173 = sld [smem:[#allocation3 + $0x1]]
        %v174 = vstv %s173
        %v175 = vmul.f32 %v174, %v169
        %177 = vrot.lane.b32.xlu0 %v175, 127
        %v178 = vpop.permute.xlu0 %177
        %v180 = vadd.f32 %v172, %v178
        %s181 = sld [smem:[#allocation3 + $0x2]]
        %v182 = vstv %s181
        %v183 = vmul.f32 %v182, %v169
        %185 = vrot.lane.b32.xlu0 %v183, 126
        %v186 = vpop.permute.xlu0 %185
        %v188 = vadd.f32 %v180, %v186
        %v189 = vxor.u32 %v188, 2147483648
        %v190 = vmul.f32 %v189, 1.442695
        %v191 = vpow.pop %v190
        %v192 = vadd.f32 %v191, 1.0
        %v193 = vrcp.pop %v192
        %v194 = vmul.f32 1.0, %v193
        %v195 = vlaneseq
        %v196 = vshrl.u32 %v195, 7
        %v197 = vsub.s32 0, %v196
        %v198 = vrot.slane %v194, %v197
        %200 = vbcast.lane.b32.xlu0 %v198, 256
        %v201 = vpop.permute.xlu0 %200
        %v204 = vunpack.c.l.s4 839922192
        %v205 = vunpack.c.0.s8 %v204
        %v206 = vlaneseq
        %v207 = vshrl.u32 %v206, 7
        %v208 = vsub.s32 %v205, %v207
        %v209 = vrot.slane %v201, %v208
        %v211 = vmul.f32 %v138, %v209
        %212 = vst [vmem:[%s137] sm:$0xff] %v211
        %s213 = sand.u32 %s57, 1
        %s214 = scalar_lea.sflag [#allocation6], %s213
        %s215 = sand.u32 %s57, 1
        %s216 = smul.addr %s215, 8
        %s217 = scalar_lea.vmem [#allocation7], %s216
        // Predicated region
        $region29: #{tpu_custom_call.1} parent=23 // pred_check
          %p218 = pneg %p67
        $region30: #{tpu_custom_call.1} parent=23 // pred_check_branch
          %220 = sbr.rel (%p218) target = $region32
        $region31: #{tpu_custom_call.1} parent=23 // pred_region
          %s222 = ssub.s32 128, 128
          %223 = vsyncadd %s214, %s222
          %s224 = smul.addr %s23, 2
          %s225 = smul.addr %s224, 64
          %s226 = scalar_lea.hbm %s2, %s225
          %s228 = sshll.u32 %s217, 4
          %s229 = int_to_ptr.vmem [resolvable:$true] %s228
          %231 = dma.vmem_to_hbm [thread:$0]  %s229, 128, %s226, %s214
        $region32: #{tpu_custom_call.1} parent=23 // pred_fallthru
          _
      $region24: #{tpu_custom_call.1} parent=5 // pred_fallthru
        _
      %p232 = scmp.le.s32.totalorder 2, %s18
      // Predicated region
      $region33: #{tpu_custom_call.1} parent=5 // pred_check
        %p233 = pneg %p232
      $region34: #{tpu_custom_call.1} parent=5 // pred_check_branch
        %235 = sbr.rel (%p233) target = $region36
      $region35: #{tpu_custom_call.1} parent=5 // pred_region
        %s236 = ssub.s32 %s18, 2
        // Predicated region
        $region37: #{tpu_custom_call.1} parent=35 // pred_check
          %p237 = pneg %p73
        $region38: #{tpu_custom_call.1} parent=35 // pred_check_branch
          %239 = sbr.rel (%p237) target = $region40
        $region39: #{tpu_custom_call.1} parent=35 // pred_region
          %s240 = sand.u32 %s58, 1
          %s241 = scalar_lea.sflag [#allocation6], %s240
          %s242 = sand.u32 %s58, 1
          %s243 = smul.addr %s242, 8
          %s244 = scalar_lea.vmem [#allocation7], %s243
          %245 = dma.done %s241, 128
        $region40: #{tpu_custom_call.1} parent=35 // pred_fallthru
          _
      $region36: #{tpu_custom_call.1} parent=5 // pred_fallthru
        _
    $region6: #{tpu_custom_call.1} parent=1 // loop_footer
      %s22 = sadd.s32 1, %s18
    $region7: #{tpu_custom_call.1} parent=1 // loop_footer_branch
      %17 = sbr.rel target = $region3
    $region8: #{tpu_custom_call.1} parent=1 // loop_exit
      _
    %246 = vsyncpa [#allocation5], 1
    %s247 = scalar_lea.sflag [#allocation5], 1
    %248 = vsyncpa %s247, 1
    %249 = vsyncpa [#allocation6], 1
    %s250 = scalar_lea.sflag [#allocation6], 1
    %251 = vsyncpa %s250, 1

</llo_original>
